<compile_context>
chip_gen: v6e
topology: v6e:2x2x1
jax: 0.10.0
libtpu: 0.0.40
codegen_flags: <defaults>
</compile_context>

<pallas_src>
import jax
import jax.numpy as jnp
import numpy as np
from jax.experimental import pallas as pl
from jax.experimental.pallas import tpu as pltpu


def _dma_copy_kernel(mem_hbm_ref, out_hbm_ref, sem):
    # Direct HBM -> HBM DMA of the whole array. No VMEM staging, no vld/vst
    # slot traffic, works for arbitrary shapes/dtypes (no (8,128) constraint
    # since nothing is mapped into VMEM).
    cp = pltpu.make_async_copy(mem_hbm_ref, out_hbm_ref, sem)
    cp.start()
    cp.wait()


def _identity_copy(memory):
    """Materialize a fresh buffer holding `memory` via a single HBM->HBM DMA."""
    nbytes = int(memory.size) * jnp.dtype(memory.dtype).itemsize
    return pl.pallas_call(
        _dma_copy_kernel,
        out_shape=jax.ShapeDtypeStruct(memory.shape, memory.dtype),
        in_specs=[pl.BlockSpec(memory_space=pl.ANY)],
        out_specs=pl.BlockSpec(memory_space=pl.ANY),
        scratch_shapes=[pltpu.SemaphoreType.DMA(())],
        cost_estimate=pl.CostEstimate(
            flops=0, transcendentals=0, bytes_accessed=2 * nbytes),
    )(memory)


def dummy_decoder_forward(tgt, memory, tgt_mask=None, memory_mask=None,
                          tgt_key_padding_mask=None,
                          memory_key_padding_mask=None,
                          use_kernel=False, **kwargs):
    """Pallas equivalent of DummyDecoder.forward: returns `memory`.

    All arguments other than `memory` are accepted for signature parity but
    are ignored, exactly like the PyTorch module.

    By default this is a zero-cost pass-through (the optimal implementation
    of an identity op). Set `use_kernel=True` to route through the Pallas
    HBM->HBM DMA copy kernel instead (e.g. when a distinct output buffer is
    explicitly required).
    """
    del tgt, tgt_mask, memory_mask, tgt_key_padding_mask
    del memory_key_padding_mask, kwargs
    if not use_kernel:
        return memory
    return _identity_copy(memory)


if __name__ == "__main__":
    key = jax.random.PRNGKey(0)
    k_tgt, k_mem = jax.random.split(key)

    S, B, D = 8, 2, 32  # seq, batch, d_model

    # Inputs consistent with an nn.TransformerDecoder-style call signature.
    tgt = jax.random.normal(k_tgt, (S, B, D), dtype=jnp.float32)
    memory = jax.random.normal(k_mem, (S, B, D), dtype=jnp.float32)
    tgt_mask = jnp.zeros((S, S), dtype=jnp.float32)
    memory_mask = jnp.zeros((S, S), dtype=jnp.float32)
    tgt_key_padding_mask = jnp.zeros((B, S), dtype=jnp.bool_)
    memory_key_padding_mask = jnp.zeros((B, S), dtype=jnp.bool_)

    memory_ref = np.asarray(memory)

    # 1) Kernel path (HBM->HBM DMA copy) — run the Pallas kernel once.
    out = dummy_decoder_forward(tgt, memory, tgt_mask, memory_mask,
                                tgt_key_padding_mask, memory_key_padding_mask,
                                use_kernel=True)
    out = jax.block_until_ready(out)
    assert out.shape == memory_ref.shape and out.dtype == memory_ref.dtype
    assert np.array_equal(np.asarray(out), memory_ref)

    # 2) Default zero-cost pass-through path.
    out2 = dummy_decoder_forward(tgt, memory, tgt_mask, memory_mask,
                                 tgt_key_padding_mask,
                                 memory_key_padding_mask)
    out2 = jax.block_until_ready(out2)
    assert np.array_equal(np.asarray(out2), memory_ref)

    # 3) Kernel path on a shape not divisible by 128 (no fallback needed —
    #    the DMA copy is shape-agnostic).
    odd = jax.random.normal(key, (3, 5, 7), dtype=jnp.float32)
    odd_out = jax.block_until_ready(_identity_copy(odd))
    assert np.array_equal(np.asarray(odd_out), np.asarray(odd))

    print("KERNEL_OK")
</pallas_src>

<mosaic_0001>
module attributes {stable_mosaic.version = 11 : i64} {
  func.func @_dma_copy_kernel(%arg0: memref<8x2x32xf32, #tpu.memory_space<any>>, %arg1: memref<8x2x32xf32, #tpu.memory_space<any>>, %arg2: memref<!tpu.dma_semaphore, #tpu.memory_space<semaphore_mem>>) attributes {dimension_semantics = [], scalar_prefetch = 0 : i64, scratch_operands = 1 : i64, tpu.core_type = #tpu.core_type<tc>} {
    tpu.enqueue_dma source(%arg0 : memref<8x2x32xf32, #tpu.memory_space<any>>) target(%arg1 : memref<8x2x32xf32, #tpu.memory_space<any>>) target_semaphore(%arg2 : memref<!tpu.dma_semaphore, #tpu.memory_space<semaphore_mem>>)
    tpu.wait_dma2 semaphore(%arg2 : memref<!tpu.dma_semaphore, #tpu.memory_space<semaphore_mem>>) src(%arg0 : memref<8x2x32xf32, #tpu.memory_space<any>>) dst(%arg1 : memref<8x2x32xf32, #tpu.memory_space<any>>)
    return
  }
}

</mosaic_0001>

<llo_original>
// kernel: tpu_custom_call.1
$region0: #{tpu_custom_call.1}
  #allocation0 [shape = 'u32[]', space=smem, size = 0x4, offset = 0x4, fixed_abs, tag = 'smem constant byte address 0x4 - core index']
  #allocation1 [shape = 'u32[144,128]{1,0:T(1,128)}', space=vmem, size = 0x12000, scoped, tag = 'internal scratch']
  #allocation2 [shape = 's32[1]{0}', space=sflag, size = 0x4, scoped, tag = 'scratch operand']
  #allocation3 [shape = 's32[]', space=sflag, size = 0x4, offset = 0, fixed_abs, tag = 'sflag constant byte address 0x0 - dummy sync flag']
  #allocation4 [shape = 'u32[0]{0}', space=smem, size = 0, offset = 0, fixed_abs, tag = 'smem constant byte address 0x0 - null']
  %s0 = inlined_call_operand.hbm [shape: f32[8,2,32], index: 0, kind: input, shape index: {}]
  %s1 = inlined_call_operand.hbm [shape: f32[8,2,32], index: 1, kind: output, shape index: {}]
  %s2 = sld [smem:[#allocation0]]
  $region2: #{tpu_custom_call.1} parent=0
    _
  %s4 = ssub.s32 1, %s2
  %s5 = scalar_select 0, %s4, %s2
  %s7 = sshll.u32 1, 14
  %s8 = sxor.u32 4294967295, %s7
  %12 = dma.general %s0, 256, %s1, [#allocation2], 131072, [#allocation4], 0, 0
  %s13 = smul.u32 8, 2
  %s14 = smul.u32 %s13, 1
  %s15 = sshll.u32 %s14, 4
  %16 = dma.done [#allocation2], %s15
  %17 = vsyncmov [#allocation2]
  %s18 = vpop.sfrf %17
  %p19 = scmp.eq.s32.totalorder %s18, 0
  %p20 = pneg %p19
  %22 = shalt.err (%p20)

</llo_original>
